<compile_context>
chip_gen: v5e
topology: v5e:2x2
jax: 0.10.0
libtpu: 0.0.40
codegen_flags: <defaults>
</compile_context>

<pallas_src>
import math

import jax
import jax.numpy as jnp
from jax.experimental import pallas as pl
from jax.experimental.pallas import tpu as pltpu


# --------------------------------------------------------------------------- #
# Kernels
# --------------------------------------------------------------------------- #
def _noisy_partial(x_ref, mu_w_ref, sg_w_ref, eps_in_ref, eps_out_ref):
    """Per-tile noisy-weight reconstruction + MXU matmul."""
    # Factorized-noise outer product rebuilt per (TK, TN) tile on the VPU;
    # FMA in f32 (v5e-safe), MXU fed bf16, f32 accumulate.
    eps_w = eps_in_ref[...] * eps_out_ref[...]                        # (TK, TN)
    w = (mu_w_ref[...].astype(jnp.float32)
         + sg_w_ref[...].astype(jnp.float32) * eps_w).astype(jnp.bfloat16)
    x = x_ref[...].astype(jnp.bfloat16)
    return jnp.dot(x, w, preferred_element_type=jnp.float32)         # (TM, TN)


def _noisy_bias(eps_out_ref, mu_b_ref, sg_b_ref):
    # epsilon_b == eps_out in the PyTorch module.
    return mu_b_ref[...] + sg_b_ref[...] * eps_out_ref[...]          # (1, TN)


def _noisy_train_kernel_acc(x_ref, mu_w_ref, sg_w_ref, eps_in_ref, eps_out_ref,
                            mu_b_ref, sg_b_ref, o_ref, acc_ref):
    k = pl.program_id(2)
    partial = _noisy_partial(x_ref, mu_w_ref, sg_w_ref, eps_in_ref, eps_out_ref)

    @pl.when(k == 0)
    def _():
        acc_ref[...] = partial            # no separate zero-init pass

    @pl.when(k > 0)
    def _():
        acc_ref[...] += partial

    @pl.when(k == pl.num_programs(2) - 1)
    def _():
        b = _noisy_bias(eps_out_ref, mu_b_ref, sg_b_ref)
        o_ref[...] = (acc_ref[...] + b).astype(o_ref.dtype)


def _noisy_train_kernel_1k(x_ref, mu_w_ref, sg_w_ref, eps_in_ref, eps_out_ref,
                           mu_b_ref, sg_b_ref, o_ref):
    partial = _noisy_partial(x_ref, mu_w_ref, sg_w_ref, eps_in_ref, eps_out_ref)
    b = _noisy_bias(eps_out_ref, mu_b_ref, sg_b_ref)
    o_ref[...] = (partial + b).astype(o_ref.dtype)


def _eval_kernel_acc(x_ref, mu_w_ref, mu_b_ref, o_ref, acc_ref):
    k = pl.program_id(2)
    partial = jnp.dot(x_ref[...].astype(jnp.bfloat16), mu_w_ref[...],
                      preferred_element_type=jnp.float32)

    @pl.when(k == 0)
    def _():
        acc_ref[...] = partial

    @pl.when(k > 0)
    def _():
        acc_ref[...] += partial

    @pl.when(k == pl.num_programs(2) - 1)
    def _():
        o_ref[...] = (acc_ref[...] + mu_b_ref[...]).astype(o_ref.dtype)


def _eval_kernel_1k(x_ref, mu_w_ref, mu_b_ref, o_ref):
    partial = jnp.dot(x_ref[...].astype(jnp.bfloat16), mu_w_ref[...],
                      preferred_element_type=jnp.float32)
    o_ref[...] = (partial + mu_b_ref[...]).astype(o_ref.dtype)


# --------------------------------------------------------------------------- #
# Tiling / padding helpers
# --------------------------------------------------------------------------- #
def _round_up(v, m):
    return ((v + m - 1) // m) * m


def _choose_tiling(dim, candidates, align):
    """Return (padded_dim, block) with block | padded_dim.

    Small dims (<= smallest candidate) use a single full-extent block (always
    legal). Larger dims are padded to `align` (and if needed to the smallest
    candidate) so blocks stay (8,128)-aligned and VMEM-bounded — never the
    full-dim fallback.
    """
    if dim <= candidates[-1]:
        return dim, dim
    for c in candidates:
        if dim % c == 0:
            return dim, c
    padded = _round_up(dim, align)
    for c in candidates:
        if padded % c == 0:
            return padded, c
    padded = _round_up(dim, candidates[-1])
    return padded, candidates[-1]


def _pad2(a, rows, cols):
    pr, pc = rows - a.shape[0], cols - a.shape[1]
    if pr == 0 and pc == 0:
        return a
    return jnp.pad(a, ((0, pr), (0, pc)))


# --------------------------------------------------------------------------- #
# Forward wrapper
# --------------------------------------------------------------------------- #
def noisy_linear_forward(x, params, noise, training=True):
    """Pallas forward of NoisyLinear.

    Layouts (chosen at init; equivalent to the PyTorch (out,in) weights
    transposed so the kernel computes x @ w with lane-dense output):
      x                : (B, in_features)            f32
      params['mu_w']   : (in_features, out_features) bf16
      params['sigma_w']: (in_features, out_features) bf16
      params['mu_b']   : (1, out_features)           f32
      params['sigma_b']: (1, out_features)           f32
      noise['eps_in']  : (in_features, 1)            f32
      noise['eps_out'] : (1, out_features)           f32  (also epsilon_b)
    """
    B, in_f = x.shape
    out_f = params["mu_w"].shape[1]

    pad_m, tm = _choose_tiling(B, (512, 256, 128), 8)
    pad_n, tn = _choose_tiling(out_f, (512, 256, 128), 128)   # 256-mult first
    pad_k, tk = _choose_tiling(in_f, (1024, 512, 256, 128), 128)
    gm, gn, gk = pad_m // tm, pad_n // tn, pad_k // tk

    # v7x shards the "parallel" grid axes across its 2 TensorCores; when the
    # whole batch fits one M tile, split N so both cores get work.
    if gm == 1 and gn == 1:
        for c in (256, 128):
            if pad_n % c == 0 and pad_n // c >= 2:
                tn, gn = c, pad_n // c
                break

    # Pad operands with zeros (no contribution to the matmul); output padding
    # is sliced off at the end.
    xp = _pad2(x, pad_m, pad_k)
    mu_w = _pad2(params["mu_w"], pad_k, pad_n)
    mu_b = _pad2(params["mu_b"], 1, pad_n)

    # Extra buffering on the weight streams when they dominate (small M tile,
    # several K steps) so short per-tile matmuls don't expose DMA latency.
    w_buf = 3 if (tm <= 128 and gk >= 3) else 2
    n_w = 2 if training else 1

    f32b, bf16b = 4, 2
    footprint = (tm * tk * f32b * 2                  # x (double-buffered)
                 + tk * tn * bf16b * w_buf * n_w     # weight stream(s)
                 + tm * tn * f32b * 2                # output (double-buffered)
                 + tm * tn * f32b                    # f32 accumulator
                 + (tk + 4 * tn) * f32b * 2)         # eps / bias vectors
    # >= default-ish 16 MiB, capped at 28 MiB so v7x (64 MiB physical) is safe.
    vmem_limit = int(min(max(footprint + (8 << 20), 16 << 20), 28 << 20))

    bytes_accessed = int(pad_m * pad_k * f32b * gn
                         + pad_k * pad_n * bf16b * n_w * gm
                         + pad_m * pad_n * f32b
                         + (pad_k + 4 * pad_n) * f32b)
    cost = pl.CostEstimate(flops=2 * pad_m * pad_n * pad_k,
                           transcendentals=0,
                           bytes_accessed=bytes_accessed)

    out_shape = jax.ShapeDtypeStruct((pad_m, pad_n), x.dtype)

    if gk > 1:
        grid = (gm, gn, gk)                    # reduction axis (K) innermost
        dims = ("parallel", "parallel", "arbitrary")
        x_spec = pl.BlockSpec((tm, tk), lambda m, n, k: (m, k))
        if w_buf > 2:
            w_spec = pl.BlockSpec((tk, tn), lambda m, n, k: (k, n),
                                  pipeline_mode=pl.Buffered(w_buf))
        else:
            w_spec = pl.BlockSpec((tk, tn), lambda m, n, k: (k, n))
        col_spec = pl.BlockSpec((tk, 1), lambda m, n, k: (k, 0))
        row_spec = pl.BlockSpec((1, tn), lambda m, n, k: (0, n))
        o_spec = pl.BlockSpec((tm, tn), lambda m, n, k: (m, n))
        scratch = [pltpu.VMEM((tm, tn), jnp.float32)]
        train_kernel, eval_kernel = _noisy_train_kernel_acc, _eval_kernel_acc
    else:
        # Single-K fast path: no accumulator scratch, write o_ref directly.
        grid = (gm, gn)
        dims = ("parallel", "parallel")
        x_spec = pl.BlockSpec((tm, tk), lambda m, n: (m, 0))
        w_spec = pl.BlockSpec((tk, tn), lambda m, n: (0, n))
        col_spec = pl.BlockSpec((tk, 1), lambda m, n: (0, 0))
        row_spec = pl.BlockSpec((1, tn), lambda m, n: (0, n))
        o_spec = pl.BlockSpec((tm, tn), lambda m, n: (m, n))
        scratch = []
        train_kernel, eval_kernel = _noisy_train_kernel_1k, _eval_kernel_1k

    cparams = pltpu.CompilerParams(dimension_semantics=dims,
                                   vmem_limit_bytes=vmem_limit)

    if training:
        sg_w = _pad2(params["sigma_w"], pad_k, pad_n)
        sg_b = _pad2(params["sigma_b"], 1, pad_n)
        eps_in = _pad2(noise["eps_in"], pad_k, 1)
        eps_out = _pad2(noise["eps_out"], 1, pad_n)
        y = pl.pallas_call(
            train_kernel,
            out_shape=out_shape,
            grid=grid,
            in_specs=[x_spec, w_spec, w_spec, col_spec, row_spec,
                      row_spec, row_spec],
            out_specs=o_spec,
            scratch_shapes=scratch,
            compiler_params=cparams,
            cost_estimate=cost,
        )(xp, mu_w, sg_w, eps_in, eps_out, mu_b, sg_b)
    else:
        # Eval path: F.linear(x, mu_w, mu_b) — no noise operands DMA'd at all.
        y = pl.pallas_call(
            eval_kernel,
            out_shape=out_shape,
            grid=grid,
            in_specs=[x_spec, w_spec, row_spec],
            out_specs=o_spec,
            scratch_shapes=scratch,
            compiler_params=cparams,
            cost_estimate=cost,
        )(xp, mu_w, mu_b)

    if pad_m != B or pad_n != out_f:
        y = y[:B, :out_f]
    return y


# --------------------------------------------------------------------------- #
# Init (mirrors reset_parameters / reset_noise) + pure-JAX reference
# --------------------------------------------------------------------------- #
def _scale_noise(eps):
    # f(x) = sign(x) * sqrt(|x|), matching NoisyLinear._scale_noise.
    return jnp.sign(eps) * jnp.sqrt(jnp.abs(eps))


def init_noisy_linear(key, in_features, out_features, std_init=0.5):
    """Deterministic init. Weights pre-transposed (in, out) and stored bf16;
    noise kept factorized (outer product rebuilt inside the kernel)."""
    k_mu_w, k_mu_b, k_nin, k_nout = jax.random.split(key, 4)
    u = 1.0 / math.sqrt(in_features)
    params = {
        "mu_w": jax.random.uniform(k_mu_w, (in_features, out_features),
                                   jnp.float32, minval=-u, maxval=u
                                   ).astype(jnp.bfloat16),
        "sigma_w": jnp.full((in_features, out_features),
                            std_init / math.sqrt(in_features), jnp.bfloat16),
        "mu_b": jax.random.uniform(k_mu_b, (1, out_features), jnp.float32,
                                   minval=-u, maxval=u),
        "sigma_b": jnp.full((1, out_features),
                            std_init / math.sqrt(out_features), jnp.float32),
    }
    eps_in = _scale_noise(jax.random.normal(k_nin, (in_features,), jnp.float32))
    eps_out = _scale_noise(jax.random.normal(k_nout, (out_features,), jnp.float32))
    noise = {
        "eps_in": eps_in.reshape(in_features, 1),
        "eps_out": eps_out.reshape(1, out_features),  # epsilon_b == eps_out
    }
    return params, noise


def _reference_forward(x, params, noise, training=True):
    """Pure-JAX reference with the same bf16 quantization the kernel applies."""
    hi = jax.lax.Precision.HIGHEST
    x32 = x.astype(jnp.bfloat16).astype(jnp.float32)
    if training:
        mu_w = params["mu_w"].astype(jnp.float32)
        sg_w = params["sigma_w"].astype(jnp.float32)
        eps_w = noise["eps_in"] * noise["eps_out"]
        w = (mu_w + sg_w * eps_w).astype(jnp.bfloat16).astype(jnp.float32)
        b = params["mu_b"] + params["sigma_b"] * noise["eps_out"]
        return jnp.dot(x32, w, precision=hi) + b
    w = params["mu_w"].astype(jnp.float32)
    return jnp.dot(x32, w, precision=hi) + params["mu_b"]


# --------------------------------------------------------------------------- #
# Demo / correctness checks
# --------------------------------------------------------------------------- #
if __name__ == "__main__":
    key = jax.random.PRNGKey(0)
    k_i1, k_x1, k_i2, k_x2, k_i3, k_x3 = jax.random.split(key, 6)

    # 1) Small shapes (single-K fast path, full-extent blocks). -------------- #
    B, IN_F, OUT_F = 8, 32, 64
    params, noise = init_noisy_linear(k_i1, IN_F, OUT_F, std_init=0.5)
    x = jax.random.normal(k_x1, (B, IN_F), jnp.float32)

    y = jax.block_until_ready(
        noisy_linear_forward(x, params, noise, training=True))
    y_ref = _reference_forward(x, params, noise, training=True)
    assert y.shape == (B, OUT_F)
    assert jnp.allclose(y, y_ref, atol=2e-4, rtol=2e-4)

    y_eval = jax.block_until_ready(
        noisy_linear_forward(x, params, noise, training=False))
    y_eval_ref = _reference_forward(x, params, noise, training=False)
    assert jnp.allclose(y_eval, y_eval_ref, atol=2e-4, rtol=2e-4)

    # 2) Moderate shapes: multi-K accumulator path + v7x parallel-split. ----- #
    B2, IN2, OUT2 = 256, 2048, 256
    params2, noise2 = init_noisy_linear(k_i2, IN2, OUT2)
    x2 = jax.random.normal(k_x2, (B2, IN2), jnp.float32)
    y2 = jax.block_until_ready(
        noisy_linear_forward(x2, params2, noise2, training=True))
    y2_ref = _reference_forward(x2, params2, noise2, training=True)
    assert y2.shape == (B2, OUT2)
    assert jnp.allclose(y2, y2_ref, atol=5e-4, rtol=5e-4)

    # 3) Ragged shapes: padding path + Buffered(3) weight streams. ----------- #
    B3, IN3, OUT3 = 200, 300, 200
    params3, noise3 = init_noisy_linear(k_i3, IN3, OUT3)
    x3 = jax.random.normal(k_x3, (B3, IN3), jnp.float32)
    y3 = jax.block_until_ready(
        noisy_linear_forward(x3, params3, noise3, training=True))
    y3_ref = _reference_forward(x3, params3, noise3, training=True)
    assert y3.shape == (B3, OUT3)
    assert jnp.allclose(y3, y3_ref, atol=5e-4, rtol=5e-4)

    print("KERNEL_OK")
</pallas_src>

<mosaic_0001>
module attributes {stable_mosaic.version = 11 : i64} {
  func.func @_noisy_train_kernel_1k(%arg0: i32, %arg1: i32, %arg2: memref<8x32xf32, #tpu.memory_space<vmem>>, %arg3: memref<32x64xbf16, #tpu.memory_space<vmem>>, %arg4: memref<32x64xbf16, #tpu.memory_space<vmem>>, %arg5: memref<32x1xf32, #tpu.memory_space<vmem>>, %arg6: memref<1x64xf32, #tpu.memory_space<vmem>>, %arg7: memref<1x64xf32, #tpu.memory_space<vmem>>, %arg8: memref<1x64xf32, #tpu.memory_space<vmem>>, %arg9: memref<8x64xf32, #tpu.memory_space<vmem>>) attributes {dimension_semantics = [#tpu.dimension_semantics<parallel>, #tpu.dimension_semantics<parallel>], iteration_bounds = array<i64: 1, 1>, scalar_prefetch = 0 : i64, scratch_operands = 0 : i64, tpu.core_type = #tpu.core_type<tc>, window_params = [{transform_indices = @transform_0, window_bounds = array<i64: 8, 32>}, {transform_indices = @transform_1, window_bounds = array<i64: 32, 64>}, {transform_indices = @transform_2, window_bounds = array<i64: 32, 64>}, {pipeline_mode = #tpu.pipeline_mode<synchronous>, transform_indices = @transform_3, window_bounds = array<i64: 32, 1>}, {transform_indices = @transform_4, window_bounds = array<i64: 1, 64>}, {transform_indices = @transform_5, window_bounds = array<i64: 1, 64>}, {transform_indices = @transform_6, window_bounds = array<i64: 1, 64>}, {transform_indices = @transform_7, window_bounds = array<i64: 8, 64>}]} {
    %c0 = arith.constant 0 : index
    %c0_0 = arith.constant 0 : index
    %0 = vector.load %arg5[%c0, %c0_0] : memref<32x1xf32, #tpu.memory_space<vmem>>, vector<32x1xf32>
    %c0_1 = arith.constant 0 : index
    %c0_2 = arith.constant 0 : index
    %1 = vector.load %arg6[%c0_1, %c0_2] : memref<1x64xf32, #tpu.memory_space<vmem>>, vector<1x64xf32>
    %2 = vector.broadcast %0 : vector<32x1xf32> to vector<32x64xf32>
    %3 = vector.broadcast %1 : vector<1x64xf32> to vector<32x64xf32>
    %4 = arith.mulf %2, %3 : vector<32x64xf32>
    %c0_3 = arith.constant 0 : index
    %c0_4 = arith.constant 0 : index
    %5 = vector.load %arg3[%c0_3, %c0_4] : memref<32x64xbf16, #tpu.memory_space<vmem>>, vector<32x64xbf16>
    %6 = arith.extf %5 : vector<32x64xbf16> to vector<32x64xf32>
    %c0_5 = arith.constant 0 : index
    %c0_6 = arith.constant 0 : index
    %7 = vector.load %arg4[%c0_5, %c0_6] : memref<32x64xbf16, #tpu.memory_space<vmem>>, vector<32x64xbf16>
    %8 = arith.extf %7 : vector<32x64xbf16> to vector<32x64xf32>
    %9 = arith.mulf %8, %4 : vector<32x64xf32>
    %10 = arith.addf %6, %9 : vector<32x64xf32>
    %11 = arith.truncf %10 : vector<32x64xf32> to vector<32x64xbf16>
    %c0_7 = arith.constant 0 : index
    %c0_8 = arith.constant 0 : index
    %12 = vector.load %arg2[%c0_7, %c0_8] : memref<8x32xf32, #tpu.memory_space<vmem>>, vector<8x32xf32>
    %13 = arith.truncf %12 : vector<8x32xf32> to vector<8x32xbf16>
    %cst = arith.constant dense<0.000000e+00> : vector<8x64xf32>
    %14 = tpu.matmul %13, %11, %cst {dimension_numbers = #tpu.dot_dimension_numbers<[1], [0], [0], [1], [0, 0, 1, 1], [], []>} : vector<8x32xbf16>, vector<32x64xbf16>, vector<8x64xf32> -> vector<8x64xf32>
    %c0_9 = arith.constant 0 : index
    %c0_10 = arith.constant 0 : index
    %15 = vector.load %arg7[%c0_9, %c0_10] : memref<1x64xf32, #tpu.memory_space<vmem>>, vector<1x64xf32>
    %c0_11 = arith.constant 0 : index
    %c0_12 = arith.constant 0 : index
    %16 = vector.load %arg8[%c0_11, %c0_12] : memref<1x64xf32, #tpu.memory_space<vmem>>, vector<1x64xf32>
    %c0_13 = arith.constant 0 : index
    %c0_14 = arith.constant 0 : index
    %17 = vector.load %arg6[%c0_13, %c0_14] : memref<1x64xf32, #tpu.memory_space<vmem>>, vector<1x64xf32>
    %18 = arith.mulf %16, %17 : vector<1x64xf32>
    %19 = arith.addf %15, %18 : vector<1x64xf32>
    %20 = vector.broadcast %19 : vector<1x64xf32> to vector<8x64xf32>
    %21 = arith.addf %14, %20 : vector<8x64xf32>
    %c0_15 = arith.constant 0 : index
    %c0_16 = arith.constant 0 : index
    %22 = vector.load %arg9[%c0_15, %c0_16] : memref<8x64xf32, #tpu.memory_space<vmem>>, vector<8x64xf32>
    tpu.vector_store %arg9[%c0_15, %c0_16], %21 {strides = array<i32>} : memref<8x64xf32, #tpu.memory_space<vmem>>, vector<8x64xf32>,
    return
  }
  func.func @transform_0(%arg0: i32, %arg1: i32) -> (i32, i32) {
    %c0_i32 = arith.constant 0 : i32
    %c0_i32_0 = arith.constant 0 : i32
    return %arg0, %c0_i32 : i32, i32
  }
  func.func @transform_1(%arg0: i32, %arg1: i32) -> (i32, i32) {
    %c0_i32 = arith.constant 0 : i32
    %c0_i32_0 = arith.constant 0 : i32
    return %c0_i32, %arg1 : i32, i32
  }
  func.func @transform_2(%arg0: i32, %arg1: i32) -> (i32, i32) {
    %c0_i32 = arith.constant 0 : i32
    %c0_i32_0 = arith.constant 0 : i32
    return %c0_i32, %arg1 : i32, i32
  }
  func.func @transform_3(%arg0: i32, %arg1: i32) -> (i32, i32) {
    %c0_i32 = arith.constant 0 : i32
    %c0_i32_0 = arith.constant 0 : i32
    %c0_i32_1 = arith.constant 0 : i32
    return %c0_i32, %c0_i32_0 : i32, i32
  }
  func.func @transform_4(%arg0: i32, %arg1: i32) -> (i32, i32) {
    %c0_i32 = arith.constant 0 : i32
    %c0_i32_0 = arith.constant 0 : i32
    return %c0_i32, %arg1 : i32, i32
  }
  func.func @transform_5(%arg0: i32, %arg1: i32) -> (i32, i32) {
    %c0_i32 = arith.constant 0 : i32
    %c0_i32_0 = arith.constant 0 : i32
    return %c0_i32, %arg1 : i32, i32
  }
  func.func @transform_6(%arg0: i32, %arg1: i32) -> (i32, i32) {
    %c0_i32 = arith.constant 0 : i32
    %c0_i32_0 = arith.constant 0 : i32
    return %c0_i32, %arg1 : i32, i32
  }
  func.func @transform_7(%arg0: i32, %arg1: i32) -> (i32, i32) {
    %c0_i32 = arith.constant 0 : i32
    return %arg0, %arg1 : i32, i32
  }
}

</mosaic_0001>

<llo_original>
// kernel: tpu_custom_call.1
$region0: #{tpu_custom_call.1}
  #allocation0 [shape = 'u32[]', space=smem, size = 0x4, offset = 0x4, fixed_abs, tag = 'smem constant byte address 0x4 - core index']
  #allocation1 [shape = 'u32[72,128]{1,0:T(1,128)}', space=vmem, size = 0x9000, scoped, tag = 'internal scratch']
  %s0 = inlined_call_operand.hbm [shape: f32[8,32], index: 0, kind: input, shape index: {}]
  %s1 = inlined_call_operand.vmem [shape: bf16[32,64], index: 1, kind: input, shape index: {}]
  %s2 = inlined_call_operand.vmem [shape: bf16[32,64], index: 2, kind: input, shape index: {}]
  %s3 = inlined_call_operand.vmem [shape: f32[32,1], index: 3, kind: input, shape index: {}]
  %s4 = inlined_call_operand.vmem [shape: f32[1,64], index: 4, kind: input, shape index: {}]
  %s5 = inlined_call_operand.vmem [shape: f32[1,64], index: 5, kind: input, shape index: {}]
  %s6 = inlined_call_operand.vmem [shape: f32[1,64], index: 6, kind: input, shape index: {}]
  %s7 = inlined_call_operand.hbm [shape: f32[8,64], index: 7, kind: output, shape index: {}]
  %s8 = sld [smem:[#allocation0]]
  $region42: #{tpu_custom_call.1} parent=0
    _
  %s10 = ssub.s32 1, %s8
  %s11 = scalar_select 0, %s10, %s8
  $region1: #{tpu_custom_call.1} parent=0
    #allocation2 [shape = 'u8[4096]{0}', space=vmem, size = 0x1000, scoped, tag = 'input window, operand 0, single buffered']
    #allocation3 [shape = 's32[1]{0}', space=sflag, size = 0x4, scoped, tag = 'scoped memory for tpu_custom_call.1']
    #allocation4 [shape = 's32[1]{0}', space=sflag, size = 0x4, scoped, tag = 'scoped memory for tpu_custom_call.1']
    #allocation5 [shape = 'u8[4096]{0}', space=vmem, size = 0x1000, scoped, tag = 'output window, operand 0, single buffered']
    %12 = vsyncpa [#allocation3], 0
    %13 = vsyncpa [#allocation4], 0
    // Predicated region
    $region2: #{tpu_custom_call.1} parent=1 // pred_check
      _
    $region3: #{tpu_custom_call.1} parent=1 // pred_check_branch
      %15 = sbr.rel (0) target = $region5
    $region4: #{tpu_custom_call.1} parent=1 // pred_region
      %17 = vsyncadd [#allocation3], 0
      %s19 = sshll.u32 %s0, 4
      %s20 = int_to_ptr.hbm [resolvable:$true] %s19
      %s21 = sshll.u32 [#allocation2], 4
      %s22 = int_to_ptr.vmem [resolvable:$true] %s21
      %24 = dma.hbm_to_vmem [thread:$0]  %s20, 128, %s22, [#allocation3]
    $region5: #{tpu_custom_call.1} parent=1 // pred_fallthru
      _
    // Predicated region
    $region6: #{tpu_custom_call.1} parent=1 // pred_check
      _
    $region7: #{tpu_custom_call.1} parent=1 // pred_check_branch
      %26 = sbr.rel (0) target = $region9
    $region8: #{tpu_custom_call.1} parent=1 // pred_region
      _
    $region9: #{tpu_custom_call.1} parent=1 // pred_fallthru
      _
    // Predicated region
    $region10: #{tpu_custom_call.1} parent=1 // pred_check
      _
    $region11: #{tpu_custom_call.1} parent=1 // pred_check_branch
      %28 = sbr.rel (0) target = $region13
    $region12: #{tpu_custom_call.1} parent=1 // pred_region
      _
    $region13: #{tpu_custom_call.1} parent=1 // pred_fallthru
      _
    // Predicated region
    $region14: #{tpu_custom_call.1} parent=1 // pred_check
      _
    $region15: #{tpu_custom_call.1} parent=1 // pred_check_branch
      %30 = sbr.rel (0) target = $region17
    $region16: #{tpu_custom_call.1} parent=1 // pred_region
      _
    $region17: #{tpu_custom_call.1} parent=1 // pred_fallthru
      _
    // Predicated region
    $region18: #{tpu_custom_call.1} parent=1 // pred_check
      _
    $region19: #{tpu_custom_call.1} parent=1 // pred_check_branch
      %32 = sbr.rel (0) target = $region21
    $region20: #{tpu_custom_call.1} parent=1 // pred_region
      _
    $region21: #{tpu_custom_call.1} parent=1 // pred_fallthru
      _
    // Predicated region
    $region22: #{tpu_custom_call.1} parent=1 // pred_check
      _
    $region23: #{tpu_custom_call.1} parent=1 // pred_check_branch
      %34 = sbr.rel (0) target = $region25
    $region24: #{tpu_custom_call.1} parent=1 // pred_region
      _
    $region25: #{tpu_custom_call.1} parent=1 // pred_fallthru
      _
    // Predicated region
    $region26: #{tpu_custom_call.1} parent=1 // pred_check
      _
    $region27: #{tpu_custom_call.1} parent=1 // pred_check_branch
      %36 = sbr.rel (0) target = $region29
    $region28: #{tpu_custom_call.1} parent=1 // pred_region
      _
    $region29: #{tpu_custom_call.1} parent=1 // pred_fallthru
      _
    // Predicated region
    $region30: #{tpu_custom_call.1} parent=1 // pred_check
      _
    $region31: #{tpu_custom_call.1} parent=1 // pred_check_branch
      %38 = sbr.rel (0) target = $region33
    $region32: #{tpu_custom_call.1} parent=1 // pred_region
      %40 = dma.done [#allocation3], 128
    $region33: #{tpu_custom_call.1} parent=1 // pred_fallthru
      _
    %v42 = vld [vmem:[%s3] sm:$0xff]
    %v43 = vld [vmem:[%s3 + $0x8] sm:$0xff]
    %v44 = vld [vmem:[%s3 + $0x10] sm:$0xff]
    %v45 = vld [vmem:[%s3 + $0x18] sm:$0xff]
    %v46 = vld [vmem:[%s4] sm:$0x1]
    %48 = vset.pattern.permute.xlu0 0
    %49 = vperm.xlu0 %48, %v42
    %v50 = vpop.permute.xlu0 %49
    %53 = vset.pattern.permute.xlu0 0
    %54 = vperm.xlu0 %53, %v43
    %v55 = vpop.permute.xlu0 %54
    %58 = vset.pattern.permute.xlu0 0
    %59 = vperm.xlu0 %58, %v44
    %v60 = vpop.permute.xlu0 %59
    %63 = vset.pattern.permute.xlu0 0
    %64 = vperm.xlu0 %63, %v45
    %v65 = vpop.permute.xlu0 %64
    %v68 = vperm.slane %v46, 0
    %v70 = vmul.f32 %v50, %v68
    %v71 = vmul.f32 %v55, %v68
    %v72 = vmul.f32 %v60, %v68
    %v73 = vmul.f32 %v65, %v68
    %v74 = vld [vmem:[%s1] sm:$0xf]
    %v75 = vld [vmem:[%s1 + $0x4] sm:$0xf]
    %v76 = vld [vmem:[%s1 + $0x8] sm:$0xf]
    %v77 = vld [vmem:[%s1 + $0xc] sm:$0xf]
    %v78 = vunpack.c.l.bf16 %v74
    %v79 = vunpack.c.l.bf16 %v75
    %v80 = vunpack.c.l.bf16 %v76
    %v81 = vunpack.c.l.bf16 %v77
    %v82 = vld [vmem:[%s2] sm:$0xf]
    %v83 = vld [vmem:[%s2 + $0x4] sm:$0xf]
    %v84 = vld [vmem:[%s2 + $0x8] sm:$0xf]
    %v85 = vld [vmem:[%s2 + $0xc] sm:$0xf]
    %v86 = vunpack.c.l.bf16 %v82
    %v87 = vunpack.c.l.bf16 %v83
    %v88 = vunpack.c.l.bf16 %v84
    %v89 = vunpack.c.l.bf16 %v85
    %v90 = vmul.f32 %v86, %v70
    %v91 = vmul.f32 %v87, %v71
    %v92 = vmul.f32 %v88, %v72
    %v93 = vmul.f32 %v89, %v73
    %v94 = vadd.f32 %v78, %v90
    %v95 = vadd.f32 %v79, %v91
    %v96 = vadd.f32 %v80, %v92
    %v97 = vadd.f32 %v81, %v93
    %v98 = vpack.c.bf16 %v95, %v94
    %v99 = vpack.c.bf16 %v97, %v96
    %v100 = vld [vmem:[#allocation2] sm:$0xff]
    %v101 = vpack.c.bf16 %v100, %v100
    %v102 = vld [vmem:[%s5] sm:$0x1]
    %v103 = vld [vmem:[%s6] sm:$0x1]
    %v104 = vmul.f32 %v103, %v46
    %v105 = vadd.f32 %v102, %v104
    %v107 = vperm.slane %v105, 0
    %vm109 = vcmask 261120
    %v111 = vsel %vm109, %v101, 0
    %113 = vmatpush.bf16.msra.mxu0 0
    %114 = vmatpush.bf16.msra.mxu0 0
    %115 = vmatpush.bf16.msra.mxu0 0
    %116 = vmatpush.bf16.msra.mxu0 0
    %117 = vmatpush.bf16.msra.mxu0 0
    %118 = vmatpush.bf16.msra.mxu0 0
    %119 = vmatpush.bf16.msra.mxu0 %v99
    %120 = vmatpush.bf16.msra.mxu0 %v98
    %121 = vmatmul.bf16.gmra.mxu0 %v111
    %v122 = vpop.f32.mrf.mxu0
    %v123 = vadd.f32 %v107, %v122
    %v124 = vpop.f32.mrf.mxu0
    %125 = vdwg.mxu0
    %vm126 = vcmask 523264
    %127 = vst.msk [vmem:[#allocation5] sm:$0xff] %vm126, %v123
    // Predicated region
    $region34: #{tpu_custom_call.1} parent=1 // pred_check
      _
    $region35: #{tpu_custom_call.1} parent=1 // pred_check_branch
      %129 = sbr.rel (0) target = $region37
    $region36: #{tpu_custom_call.1} parent=1 // pred_region
      %131 = vsyncadd [#allocation4], 0
      %s133 = sshll.u32 [#allocation5], 4
      %s134 = int_to_ptr.vmem [resolvable:$true] %s133
      %s135 = sshll.u32 %s7, 4
      %s136 = int_to_ptr.hbm [resolvable:$true] %s135
      %138 = dma.vmem_to_hbm [thread:$0]  %s134, 128, %s136, [#allocation4]
    $region37: #{tpu_custom_call.1} parent=1 // pred_fallthru
      _
    // Predicated region
    $region38: #{tpu_custom_call.1} parent=1 // pred_check
      _
    $region39: #{tpu_custom_call.1} parent=1 // pred_check_branch
      %140 = sbr.rel (0) target = $region41
    $region40: #{tpu_custom_call.1} parent=1 // pred_region
      %142 = dma.done [#allocation4], 128
    $region41: #{tpu_custom_call.1} parent=1 // pred_fallthru
      _
    %143 = vsyncpa [#allocation3], 1
    %144 = vsyncpa [#allocation4], 1

</llo_original>
